<compile_context>
chip_gen: v5e
topology: v5e:2x2
jax: 0.10.0
libtpu: 0.0.40
codegen_flags: <defaults>
</compile_context>

<pallas_src>
import math
import functools

import jax
import jax.numpy as jnp
from jax.experimental import pallas as pl
from jax.experimental.pallas import tpu as pltpu

_LANES = 128


def make_positional_encoding(max_len: int, d_model: int, dtype=jnp.float32):
    """Builds the `pe` buffer exactly like the PyTorch __init__ (shape (max_len, d_model))."""
    position = jnp.arange(max_len, dtype=jnp.float32)[:, None]           # (max_len, 1)
    div_term = jnp.exp(
        jnp.arange(0, d_model, 2, dtype=jnp.float32) * -(math.log(10000.0) / d_model)
    )                                                                    # (ceil(d_model/2),)
    angles = position * div_term                                         # (max_len, ceil(d_model/2))
    pe = jnp.zeros((max_len, d_model), dtype=jnp.float32)
    pe = pe.at[:, 0::2].set(jnp.sin(angles))
    pe = pe.at[:, 1::2].set(jnp.cos(angles)[:, : d_model // 2])          # guard odd d_model
    return pe.astype(dtype)


# ----------------------------------------------------------------------------
# Kernels
# ----------------------------------------------------------------------------
def _add_pe_kernel(x_ref, pe_ref, o_ref):
    # x block: (1, TR, L); pe block: (TR, L) -> broadcast add over the batch dim.
    o_ref[...] = (x_ref[...] + pe_ref[...]).astype(o_ref.dtype)


def _add_pe_dropout_kernel(x_ref, pe_ref, bits_ref, o_ref, *, threshold: int, scale: float):
    # Inverted dropout via uint32 threshold compare: P(keep) = 1 - p.
    y = x_ref[...] + pe_ref[...]
    keep = bits_ref[...] >= jnp.uint32(threshold)
    o_ref[...] = jnp.where(keep, y * scale, jnp.zeros_like(y)).astype(o_ref.dtype)


# ----------------------------------------------------------------------------
# Tiling helpers
# ----------------------------------------------------------------------------
def _sublane_multiple(itemsize: int) -> int:
    # 8 rows for 32-bit, 16 for 16-bit, 32 for 8-bit (sub-32-bit packs along sublanes).
    return max(8, 32 // max(itemsize, 1))


def _default_tile_target() -> int:
    # Bigger tiles on v7x: per-step fixed cost (~0.35 us) is a larger fraction of
    # the per-step DMA time as HBM bandwidth grows (3.2 TB/s on v7x).
    try:
        kind = jax.devices()[0].device_kind.lower()
    except Exception:
        kind = ""
    if "v7" in kind:
        return 4 << 20
    return 2 << 20


def _pick_row_tile(num_rows: int, row_bytes: int, sub: int, batch: int, target_bytes: int) -> int:
    """Row tile: ~target_bytes per block, dtype-aware sublane rounding, >= ~4 grid steps."""
    tr = (target_bytes // max(row_bytes, 1)) // sub * sub
    tr = max(tr, sub)
    tr = min(tr, num_rows)
    # Keep >= ~4 total grid steps when possible so the v7x megacore can split the
    # ("parallel","parallel") grid across 2 TCs and the DMA pipeline has overlap.
    min_steps = 4
    if batch * pl.cdiv(num_rows, tr) < min_steps:
        want_tiles = pl.cdiv(min_steps, batch)
        tr2 = pl.cdiv(num_rows, want_tiles)
        tr2 = pl.cdiv(tr2, sub) * sub
        if sub <= tr2 < num_rows:
            tr = min(tr, tr2)
    # Block rows must be a multiple of the sublane packing or span the full extent.
    if tr < num_rows and tr % sub:
        tr = num_rows
    return min(tr, num_rows)


# ----------------------------------------------------------------------------
# Pallas forward
# ----------------------------------------------------------------------------
def positional_encoding_pallas(x, pe, *, p: float = 0.1, training: bool = False,
                               seed: int = 0, target_tile_bytes: int | None = None):
    """Pallas forward: x (B, S, D), pe (max_len, D) -> (B, S, D)."""
    B, S, D = x.shape
    max_len = pe.shape[0]
    assert S <= max_len, "sequence longer than positional-encoding buffer"

    dtype = x.dtype
    itemsize = jnp.dtype(dtype).itemsize
    pe = pe.astype(dtype)          # halve pe DMA bytes for bf16 x; no in-kernel promote

    apply_dropout = bool(training) and float(p) > 0.0
    if apply_dropout and float(p) >= 1.0:
        # Threshold clamping would otherwise give keep-prob 2^-32 instead of 0.
        return jnp.zeros_like(x)

    if target_tile_bytes is None:
        target_tile_bytes = _default_tile_target()

    # ---- lane-dense layout: flatten (S, D), pad to a multiple of 128 lanes ----
    flat = S * D
    L = _LANES
    R = pl.cdiv(flat, L)
    padded = R * L

    x_flat = x.reshape(B, flat)
    pe_flat = pe[:S].reshape(flat)
    if padded != flat:
        x_flat = jnp.pad(x_flat, ((0, 0), (0, padded - flat)))
        pe_flat = jnp.pad(pe_flat, (0, padded - flat))
    x_rows = x_flat.reshape(B, R, L)
    pe_rows = pe_flat.reshape(R, L)

    sub = _sublane_multiple(itemsize)
    TR = _pick_row_tile(R, L * itemsize, sub, B, target_tile_bytes)
    num_row_tiles = pl.cdiv(R, TR)

    in_specs = [
        pl.BlockSpec((1, TR, L), lambda r, b: (b, r, 0)),   # x
        pl.BlockSpec((TR, L), lambda r, b: (r, 0)),         # pe (resident across inner b axis)
    ]
    operands = [x_rows, pe_rows]
    bytes_accessed = (2 * B) * padded * itemsize + padded * itemsize   # x in + out + pe
    flops = B * padded

    block_bytes = TR * L * itemsize
    bits_block_bytes = 0

    if apply_dropout:
        # TODO(synk): on hardware the on-chip PRNG (pltpu.prng_seed/prng_random_bits)
        # would avoid this extra HBM stream, but it has no interpret/CPU lowering here.
        bits = jax.random.bits(jax.random.PRNGKey(seed), (B, R, L), dtype=jnp.uint32)
        in_specs.append(pl.BlockSpec((1, TR, L), lambda r, b: (b, r, 0)))
        operands.append(bits)
        bytes_accessed += B * padded * 4
        flops = 3 * B * padded
        bits_block_bytes = TR * L * 4
        threshold = min(int(round(float(p) * 4294967296.0)), 4294967295)
        kernel = functools.partial(
            _add_pe_dropout_kernel, threshold=threshold, scale=float(1.0 / (1.0 - float(p)))
        )
    else:
        kernel = _add_pe_kernel

    # Double-buffered VMEM footprint (x, out, pe blocks + optional bits block) + headroom,
    # capped below v7x's 64 MiB physical VMEM.  Set explicitly so v5e's 16 MiB default
    # scoped limit does not reject the larger tiles.
    footprint = 2 * (3 * block_bytes + bits_block_bytes)
    vmem_limit = int(min(max(footprint + (8 << 20), 16 << 20), 56 << 20))

    extra_kwargs = {}
    if hasattr(pl, "CostEstimate"):
        extra_kwargs["cost_estimate"] = pl.CostEstimate(
            flops=int(flops), transcendentals=0, bytes_accessed=int(bytes_accessed)
        )

    out_rows = pl.pallas_call(
        kernel,
        out_shape=jax.ShapeDtypeStruct((B, R, L), dtype),
        grid=(num_row_tiles, B),                       # batch innermost: pe block stays resident
        in_specs=in_specs,
        out_specs=pl.BlockSpec((1, TR, L), lambda r, b: (b, r, 0)),
        input_output_aliases={0: 0},                   # output reuses x's HBM buffer
        compiler_params=pltpu.CompilerParams(
            dimension_semantics=("parallel", "parallel"),
            vmem_limit_bytes=vmem_limit,
        ),
        **extra_kwargs,
    )(*operands)

    out = out_rows.reshape(B, padded)
    if padded != flat:
        out = out[:, :flat]
    return out.reshape(B, S, D)


def positional_encoding_forward(x, pe, *, p: float = 0.1, training: bool = False, seed: int = 0):
    """Module forward. Eval mode (dropout = identity) and tiny tensors use plain fused XLA."""
    B, S, D = x.shape
    if (not training) or p <= 0.0:
        return (x + pe[None, :S, :].astype(x.dtype)).astype(x.dtype)
    if x.size < 65536:
        # Tiny inputs: pallas_call fixed cost + under-filled blocks dominate.
        y = x + pe[None, :S, :].astype(x.dtype)
        if p >= 1.0:
            return jnp.zeros_like(y)
        keep = jax.random.bernoulli(jax.random.PRNGKey(seed), 1.0 - p, y.shape)
        return jnp.where(keep, y / (1.0 - p), jnp.zeros_like(y)).astype(x.dtype)
    return positional_encoding_pallas(x, pe, p=p, training=True, seed=seed)


if __name__ == "__main__":
    # Small shapes consistent with the module: batch=2, seq=8, d_model=32.
    B, S, D = 2, 8, 32
    MAX_LEN = 64
    P = 0.1

    key = jax.random.PRNGKey(0)
    x = jax.random.normal(key, (B, S, D), dtype=jnp.float32)
    pe = make_positional_encoding(MAX_LEN, D)

    ref = x + pe[None, :S, :]

    # 1) Deterministic add through the Pallas kernel (exact check vs pure JAX).
    out_det = jax.block_until_ready(positional_encoding_pallas(x, pe, p=P, training=False))
    assert out_det.shape == (B, S, D)
    assert jnp.allclose(out_det, ref, atol=1e-6), "pallas add mismatch vs reference"

    # 2) Module-level eval forward (dropout is identity).
    out_eval = jax.block_until_ready(positional_encoding_forward(x, pe, p=P, training=False))
    assert jnp.allclose(out_eval, ref, atol=1e-6)

    # 3) Training mode through the Pallas dropout kernel: every element must be
    #    0 or (x+pe)/(1-p).
    out_train = jax.block_until_ready(
        positional_encoding_pallas(x, pe, p=P, training=True, seed=123)
    )
    scaled = ref / (1.0 - P)
    valid = jnp.isclose(out_train, 0.0, atol=1e-6) | jnp.isclose(
        out_train, scaled, rtol=1e-5, atol=1e-6
    )
    assert bool(jnp.all(valid)), "dropout output is not in {0, (x+pe)/(1-p)}"

    # 4) Training mode through the module forward (tiny-input XLA path).
    out_train_fwd = jax.block_until_ready(
        positional_encoding_forward(x, pe, p=P, training=True, seed=7)
    )
    valid_fwd = jnp.isclose(out_train_fwd, 0.0, atol=1e-6) | jnp.isclose(
        out_train_fwd, scaled, rtol=1e-5, atol=1e-6
    )
    assert bool(jnp.all(valid_fwd)), "forward dropout output is not in {0, (x+pe)/(1-p)}"
    # TODO(synk): the dropout mask comes from jax.random (threefry), so it cannot
    # bit-match torch's RNG stream (it is still a valid inverted dropout).

    print("KERNEL_OK")
</pallas_src>

<mosaic_0001>
module attributes {stable_mosaic.version = 11 : i64} {
  func.func @_add_pe_kernel(%arg0: i32, %arg1: i32, %arg2: memref<1x2x128xf32, #tpu.memory_space<vmem>>, %arg3: memref<2x128xf32, #tpu.memory_space<vmem>>, %arg4: memref<1x2x128xf32, #tpu.memory_space<vmem>>) attributes {dimension_semantics = [#tpu.dimension_semantics<parallel>, #tpu.dimension_semantics<parallel>], iteration_bounds = array<i64: 1, 2>, scalar_prefetch = 0 : i64, scratch_operands = 0 : i64, tpu.core_type = #tpu.core_type<tc>, window_params = [{transform_indices = @transform_0, window_bounds = array<i64: 1, 2, 128>}, {transform_indices = @transform_1, window_bounds = array<i64: 2, 128>}, {transform_indices = @transform_2, window_bounds = array<i64: 1, 2, 128>}]} {
    %c0 = arith.constant 0 : index
    %c0_0 = arith.constant 0 : index
    %c0_1 = arith.constant 0 : index
    %0 = vector.load %arg2[%c0, %c0_0, %c0_1] : memref<1x2x128xf32, #tpu.memory_space<vmem>>, vector<1x2x128xf32>
    %c0_2 = arith.constant 0 : index
    %c0_3 = arith.constant 0 : index
    %1 = vector.load %arg3[%c0_2, %c0_3] : memref<2x128xf32, #tpu.memory_space<vmem>>, vector<2x128xf32>
    %2 = vector.shape_cast %1 : vector<2x128xf32> to vector<1x2x128xf32>
    %3 = arith.addf %0, %2 : vector<1x2x128xf32>
    %c0_4 = arith.constant 0 : index
    %c0_5 = arith.constant 0 : index
    %c0_6 = arith.constant 0 : index
    %4 = vector.load %arg4[%c0_4, %c0_5, %c0_6] : memref<1x2x128xf32, #tpu.memory_space<vmem>>, vector<1x2x128xf32>
    tpu.vector_store %arg4[%c0_4, %c0_5, %c0_6], %3 {strides = array<i32>} : memref<1x2x128xf32, #tpu.memory_space<vmem>>, vector<1x2x128xf32>,
    return
  }
  func.func @transform_0(%arg0: i32, %arg1: i32) -> (i32, i32, i32) {
    %c0_i32 = arith.constant 0 : i32
    %c0_i32_0 = arith.constant 0 : i32
    return %arg1, %arg0, %c0_i32 : i32, i32, i32
  }
  func.func @transform_1(%arg0: i32, %arg1: i32) -> (i32, i32) {
    %c0_i32 = arith.constant 0 : i32
    %c0_i32_0 = arith.constant 0 : i32
    return %arg0, %c0_i32 : i32, i32
  }
  func.func @transform_2(%arg0: i32, %arg1: i32) -> (i32, i32, i32) {
    %c0_i32 = arith.constant 0 : i32
    %c0_i32_0 = arith.constant 0 : i32
    return %arg1, %arg0, %c0_i32 : i32, i32, i32
  }
}

</mosaic_0001>

<llo_original>
// kernel: tpu_custom_call.1
$region0: #{tpu_custom_call.1}
  #allocation0 [shape = 'u32[]', space=smem, size = 0x4, offset = 0x4, fixed_abs, tag = 'smem constant byte address 0x4 - core index']
  #allocation1 [shape = 'u32[72,128]{1,0:T(1,128)}', space=vmem, size = 0x9000, scoped, tag = 'internal scratch']
  %s0 = inlined_call_operand.hbm [shape: f32[2,2,128], index: 0, kind: input, shape index: {}, may-alias: {0,2}]
  %s1 = inlined_call_operand.vmem [shape: f32[2,128], index: 1, kind: input, shape index: {}]
  %s2 = inlined_call_operand.hbm [shape: f32[2,2,128], index: 2, kind: output, shape index: {}, may-alias: {0,2}]
  %s3 = sld [smem:[#allocation0]]
  $region45: #{tpu_custom_call.1} parent=0
    _
  %s5 = ssub.s32 1, %s3
  %s6 = scalar_select 0, %s5, %s3
  $region1: #{tpu_custom_call.1} parent=0
    #allocation2 [shape = 'u8[2048]{0}', space=vmem, size = 0x800, scoped, tag = 'input window, operand 0']
    #allocation3 [shape = 's32[2]{0}', space=sflag, size = 0x8, scoped, tag = 'scoped memory for tpu_custom_call.1']
    #allocation4 [shape = 's32[2]{0}', space=sflag, size = 0x8, scoped, tag = 'scoped memory for tpu_custom_call.1']
    #allocation5 [shape = 'u8[2048]{0}', space=vmem, size = 0x800, scoped, tag = 'output window, operand 0']
    %7 = vsyncpa [#allocation3], 0
    %s8 = scalar_lea.sflag [#allocation3], 1
    %9 = vsyncpa %s8, 0
    %10 = vsyncpa [#allocation4], 0
    %s11 = scalar_lea.sflag [#allocation4], 1
    %12 = vsyncpa %s11, 0
    loop: start=0, step=1, limit=4
    $region2: #{tpu_custom_call.1} parent=1 // loop_pre_header
      _
    $region3: #{tpu_custom_call.1} parent=1 // loop_header
      %s14 = sphi 0, %s18
      %p15 = scmp.ge.s32.totalorder %s14, 4
      %s21 = sphi 0, %s33
      %s22 = sphi 0, %s29
      %s23 = sphi 0, %s21
      %s24 = sphi 0, %s22
      %s25 = sphi 0, %s23
      %s26 = sphi 0, %s24
      %s38 = sphi 0, %s40
      %s41 = sphi 0, %s38
      %s42 = sphi 0, %s41
      %s58 = sphi 0, %s42
      %s64 = sphi 0, %s66
      %s67 = sphi 0, %s64
      %s68 = sphi 0, %s67
      %s84 = sphi 0, %s68
      %s92 = sphi 0, %s94
      %s95 = sphi 0, %s92
      %s96 = sphi 0, %s95
      %s112 = sphi 0, %s96
    $region4: #{tpu_custom_call.1} parent=1 // loop_header_branch
      %17 = sbr.rel (%p15) target = $region8
    $region5: #{tpu_custom_call.1} parent=1 // loop_body
      %s19 = ssub.s32 %s14, 1
      %s20 = ssub.s32 %s14, 2
      %s27 = sadd.s32 1, %s22
      %p28 = scmp.ge.s32.totalorder %s27, 2
      %s29 = scalar_select %p28, 0, %s27
      %s30 = sadd.s32 1, %s21
      %s31 = scalar_select %p28, %s30, %s21
      %p32 = scmp.ge.s32.totalorder %s31, 1
      %s33 = scalar_select %p32, 0, %s31
      %s34 = ssub.s32 %s22, %s29
      %s35 = ssub.s32 %s21, %s33
      %s36 = sor.u32 %s34, %s35
      %p37 = scmp.eq.s32.totalorder %s36, 0
      %s39 = sadd.s32 %s38, 1
      %s40 = scalar_select %p37, %s38, %s39
      %p43 = pneg %p37
      %p44 = scmp.eq.s32.totalorder %s14, 1
      %p45 = por %p43, %p44
      %p46 = scmp.ne.s32.totalorder %s38, %s41
      %p47 = scmp.eq.s32.totalorder %s14, 0
      %p48 = por %p46, %p47
      %p49 = scmp.ne.s32.totalorder %s38, %s41
      %p50 = scmp.eq.s32.totalorder %s19, 1
      %p51 = por %p49, %p50
      %p52 = scmp.ne.s32.totalorder %s41, %s42
      %p53 = scmp.eq.s32.totalorder %s19, 0
      %p54 = por %p52, %p53
      %p55 = scmp.ne.s32.totalorder %s41, %s42
      %p56 = scmp.eq.s32.totalorder %s20, 1
      %p57 = por %p55, %p56
      %p59 = scmp.ne.s32.totalorder %s42, %s58
      %p60 = scmp.eq.s32.totalorder %s20, 0
      %p61 = por %p59, %p60
      %s62 = ssub.s32 %s21, %s33
      %p63 = scmp.eq.s32.totalorder %s62, 0
      %s65 = sadd.s32 %s64, 1
      %s66 = scalar_select %p63, %s64, %s65
      %p69 = pneg %p63
      %p70 = scmp.eq.s32.totalorder %s14, 1
      %p71 = por %p69, %p70
      %p72 = scmp.ne.s32.totalorder %s64, %s67
      %p73 = scmp.eq.s32.totalorder %s14, 0
      %p74 = por %p72, %p73
      %p75 = scmp.ne.s32.totalorder %s64, %s67
      %p76 = scmp.eq.s32.totalorder %s19, 1
      %p77 = por %p75, %p76
      %p78 = scmp.ne.s32.totalorder %s67, %s68
      %p79 = scmp.eq.s32.totalorder %s19, 0
      %p80 = por %p78, %p79
      %p81 = scmp.ne.s32.totalorder %s67, %s68
      %p82 = scmp.eq.s32.totalorder %s20, 1
      %p83 = por %p81, %p82
      %p85 = scmp.ne.s32.totalorder %s68, %s84
      %p86 = scmp.eq.s32.totalorder %s20, 0
      %p87 = por %p85, %p86
      %s88 = ssub.s32 %s22, %s29
      %s89 = ssub.s32 %s21, %s33
      %s90 = sor.u32 %s88, %s89
      %p91 = scmp.eq.s32.totalorder %s90, 0
      %s93 = sadd.s32 %s92, 1
      %s94 = scalar_select %p91, %s92, %s93
      %p97 = pneg %p91
      %p98 = scmp.eq.s32.totalorder %s14, 1
      %p99 = por %p97, %p98
      %p100 = scmp.ne.s32.totalorder %s92, %s95
      %p101 = scmp.eq.s32.totalorder %s14, 0
      %p102 = por %p100, %p101
      %p103 = scmp.ne.s32.totalorder %s92, %s95
      %p104 = scmp.eq.s32.totalorder %s19, 1
      %p105 = por %p103, %p104
      %p106 = scmp.ne.s32.totalorder %s95, %s96
      %p107 = scmp.eq.s32.totalorder %s19, 0
      %p108 = por %p106, %p107
      %p109 = scmp.ne.s32.totalorder %s95, %s96
      %p110 = scmp.eq.s32.totalorder %s20, 1
      %p111 = por %p109, %p110
      %p113 = scmp.ne.s32.totalorder %s96, %s112
      %p114 = scmp.eq.s32.totalorder %s20, 0
      %p115 = por %p113, %p114
      %p116 = scmp.le.s32.totalorder 1, %s14
      %p117 = scmp.lt.s32.totalorder %s14, 3
      %p118 = pnand %p116, %p117
      %p119 = pneg %p118
      // Predicated region
      $region9: #{tpu_custom_call.1} parent=5 // pred_check
        _
      $region10: #{tpu_custom_call.1} parent=5 // pred_check_branch
        %121 = sbr.rel (%p118) target = $region12
      $region11: #{tpu_custom_call.1} parent=5 // pred_region
        %s122 = ssub.s32 %s14, 1
        // Predicated region
        $region13: #{tpu_custom_call.1} parent=11 // pred_check
          %p123 = pneg %p80
        $region14: #{tpu_custom_call.1} parent=11 // pred_check_branch
          %125 = sbr.rel (%p123) target = $region16
        $region15: #{tpu_custom_call.1} parent=11 // pred_region
          %p126 = scmp.lt.s32.totalorder %s23, 0
          %s127 = scalar_select %p126, %s23, 0
          %s128 = smul.addr %s127, 2
          %s129 = scalar_lea.vmem %s1, %s128
        $region16: #{tpu_custom_call.1} parent=11 // pred_fallthru
          _
      $region12: #{tpu_custom_call.1} parent=5 // pred_fallthru
        _
      %p130 = scmp.lt.s32.totalorder %s14, 2
      // Predicated region
      $region17: #{tpu_custom_call.1} parent=5 // pred_check
        %p131 = pneg %p130
      $region18: #{tpu_custom_call.1} parent=5 // pred_check_branch
        %133 = sbr.rel (%p131) target = $region20
      $region19: #{tpu_custom_call.1} parent=5 // pred_region
        // Predicated region
        $region21: #{tpu_custom_call.1} parent=19 // pred_check
          %p134 = pneg %p48
        $region22: #{tpu_custom_call.1} parent=19 // pred_check_branch
          %136 = sbr.rel (%p134) target = $region24
        $region23: #{tpu_custom_call.1} parent=19 // pred_region
          %s137 = sand.u32 %s38, 1
          %s138 = scalar_lea.sflag [#allocation3], %s137
          %s139 = sand.u32 %s38, 1
          %s140 = smul.addr %s139, 2
          %s141 = scalar_lea.vmem [#allocation2], %s140
          %143 = vsyncadd %s138, 0
          %s144 = sadd.s32 %s21, %s22
          %s145 = smul.addr %s144, 2
          %s146 = scalar_lea.hbm %s0, %s145
          %s148 = sshll.u32 %s146, 4
          %s149 = int_to_ptr.hbm [resolvable:$true] %s148
          %s150 = sshll.u32 %s141, 4
          %s151 = int_to_ptr.vmem [resolvable:$true] %s150
          %153 = dma.hbm_to_vmem [thread:$0]  %s149, 32, %s151, %s138
        $region24: #{tpu_custom_call.1} parent=19 // pred_fallthru
          _
      $region20: #{tpu_custom_call.1} parent=5 // pred_fallthru
        _
      %p154 = scmp.le.s32.totalorder 1, %s14
      %p155 = scmp.lt.s32.totalorder %s14, 3
      %p156 = pnand %p154, %p155
      %p157 = pneg %p156
      // Predicated region
      $region25: #{tpu_custom_call.1} parent=5 // pred_check
        _
      $region26: #{tpu_custom_call.1} parent=5 // pred_check_branch
        %159 = sbr.rel (%p156) target = $region28
      $region27: #{tpu_custom_call.1} parent=5 // pred_region
        %s160 = ssub.s32 %s14, 1
        %s161 = sand.u32 %s41, 1
        %s162 = scalar_lea.sflag [#allocation3], %s161
        %s163 = sand.u32 %s41, 1
        %s164 = smul.addr %s163, 2
        %s165 = scalar_lea.vmem [#allocation2], %s164
        // Predicated region
        $region29: #{tpu_custom_call.1} parent=27 // pred_check
          %p166 = pneg %p54
        $region30: #{tpu_custom_call.1} parent=27 // pred_check_branch
          %168 = sbr.rel (%p166) target = $region32
        $region31: #{tpu_custom_call.1} parent=27 // pred_region
          %170 = dma.done %s162, 32
        $region32: #{tpu_custom_call.1} parent=27 // pred_fallthru
          _
        %s171 = sand.u32 %s41, 1
        %s172 = scalar_lea.sflag [#allocation3], %s171
        %s173 = sand.u32 %s41, 1
        %s174 = smul.addr %s173, 2
        %s175 = scalar_lea.vmem [#allocation2], %s174
        %p176 = pneg %p54
        %p177 = pneg %p51
        %p178 = scmp.lt.s32.totalorder %s23, 0
        %s179 = scalar_select %p178, %s23, 0
        %s180 = smul.addr %s179, 2
        %s181 = scalar_lea.vmem %s1, %s180
        %p182 = pneg %p80
        %p183 = pneg %p77
        %p184 = pneg %p108
        %p185 = pneg %p105
        %s186 = sand.u32 %s95, 1
        %s187 = scalar_lea.sflag [#allocation4], %s186
        %s188 = sand.u32 %s95, 1
        %s189 = smul.addr %s188, 2
        %s190 = scalar_lea.vmem [#allocation5], %s189
        %p191 = scmp.lt.s32.totalorder %s23, 0
        %s192 = scalar_select %p191, %s23, 0
        %s193 = smul.addr %s192, 2
        %s194 = scalar_lea.vmem %s1, %s193
        %v195 = vld [vmem:[%s165] sm:$0x3]
        %v196 = vld [vmem:[%s194] sm:$0x3]
        %v197 = vadd.f32 %v195, %v196
        %198 = vst [vmem:[%s190] sm:$0x3] %v197
        %s199 = sand.u32 %s95, 1
        %s200 = scalar_lea.sflag [#allocation4], %s199
        %s201 = sand.u32 %s95, 1
        %s202 = smul.addr %s201, 2
        %s203 = scalar_lea.vmem [#allocation5], %s202
        // Predicated region
        $region33: #{tpu_custom_call.1} parent=27 // pred_check
          %p204 = pneg %p105
        $region34: #{tpu_custom_call.1} parent=27 // pred_check_branch
          %206 = sbr.rel (%p204) target = $region36
        $region35: #{tpu_custom_call.1} parent=27 // pred_region
          %208 = vsyncadd %s200, 0
          %s209 = sadd.s32 %s23, %s24
          %s210 = smul.addr %s209, 2
          %s211 = scalar_lea.hbm %s2, %s210
          %s213 = sshll.u32 %s203, 4
          %s214 = int_to_ptr.vmem [resolvable:$true] %s213
          %s215 = sshll.u32 %s211, 4
          %s216 = int_to_ptr.hbm [resolvable:$true] %s215
          %218 = dma.vmem_to_hbm [thread:$0]  %s214, 32, %s216, %s200
        $region36: #{tpu_custom_call.1} parent=27 // pred_fallthru
          _
      $region28: #{tpu_custom_call.1} parent=5 // pred_fallthru
        _
      %p219 = scmp.le.s32.totalorder 2, %s14
      // Predicated region
      $region37: #{tpu_custom_call.1} parent=5 // pred_check
        %p220 = pneg %p219
      $region38: #{tpu_custom_call.1} parent=5 // pred_check_branch
        %222 = sbr.rel (%p220) target = $region40
      $region39: #{tpu_custom_call.1} parent=5 // pred_region
        %s223 = ssub.s32 %s14, 2
        // Predicated region
        $region41: #{tpu_custom_call.1} parent=39 // pred_check
          %p224 = pneg %p111
        $region42: #{tpu_custom_call.1} parent=39 // pred_check_branch
          %226 = sbr.rel (%p224) target = $region44
        $region43: #{tpu_custom_call.1} parent=39 // pred_region
          %s227 = sand.u32 %s96, 1
          %s228 = scalar_lea.sflag [#allocation4], %s227
          %s229 = sand.u32 %s96, 1
          %s230 = smul.addr %s229, 2
          %s231 = scalar_lea.vmem [#allocation5], %s230
          %233 = dma.done %s228, 32
        $region44: #{tpu_custom_call.1} parent=39 // pred_fallthru
          _
      $region40: #{tpu_custom_call.1} parent=5 // pred_fallthru
        _
    $region6: #{tpu_custom_call.1} parent=1 // loop_footer
      %s18 = sadd.s32 1, %s14
    $region7: #{tpu_custom_call.1} parent=1 // loop_footer_branch
      %13 = sbr.rel target = $region3
    $region8: #{tpu_custom_call.1} parent=1 // loop_exit
      _
    %234 = vsyncpa [#allocation3], 1
    %s235 = scalar_lea.sflag [#allocation3], 1
    %236 = vsyncpa %s235, 1
    %237 = vsyncpa [#allocation4], 1
    %s238 = scalar_lea.sflag [#allocation4], 1
    %239 = vsyncpa %s238, 1

</llo_original>
